<compile_context>
chip_gen: v5e
topology: v5e:2x2
jax: 0.10.0
libtpu: 0.0.40
codegen_flags: <defaults>
</compile_context>

<pallas_src>
import jax
import jax.numpy as jnp
from jax.experimental import pallas as pl
from jax.experimental.pallas import tpu as pltpu


def _wce_kernel(x_ref, t_ref, w_ref, out_ref):
    """One grid step handles a (TB, TN, C) tile of logits."""
    # Initialize the per-b resident accumulator on the first N-tile.
    @pl.when(pl.program_id(1) == 0)
    def _():
        out_ref[...] = jnp.zeros_like(out_ref)

    x = x_ref[...].astype(jnp.float32)   # (TB, TN, C) logits, upcast in-kernel
    t = t_ref[...]                        # (TB, TN, 1)  int32 targets
    w = w_ref[...].astype(jnp.float32)    # (TB, 1,  C)  class weights

    tb, tn, c = x.shape
    class_ids = jax.lax.broadcasted_iota(jnp.int32, (tb, tn, c), 2)
    onehot = (class_ids == t).astype(jnp.float32)                     # (TB, TN, C)

    # Numerically stable log-sum-exp over the class axis.
    m = jnp.max(x, axis=-1, keepdims=True)                            # (TB, TN, 1)
    lse = m + jnp.log(jnp.sum(jnp.exp(x - m), axis=-1, keepdims=True))  # (TB, TN, 1)

    # Fused gather: per-sample weighted NLL = w[t] * (lse - x[t])
    contrib = onehot * (w * (lse - x))                                # (TB, TN, C)
    row = jnp.sum(contrib, axis=-1)                                   # (TB, TN)
    per_b = jnp.sum(row, axis=-1, keepdims=True)                      # (TB, 1)

    # Accumulate partial sums (broadcast across the 128 lanes of the output).
    out_ref[...] = out_ref[...] + per_b


def _divisor_tile(dim, max_tile, multiple=1):
    """Largest divisor of `dim` that is <= max_tile and a multiple of `multiple`.
    Falls back to `dim` itself (full extent) if no such divisor exists."""
    best = None
    d = 1
    while d * d <= dim:
        if dim % d == 0:
            for cand in (d, dim // d):
                if cand <= max_tile and cand % multiple == 0:
                    if best is None or cand > best:
                        best = cand
        d += 1
    return best if best is not None else dim


def weighted_cross_entropy_loss(logits, targets, weights=None, reduction="mean",
                                vmem_block_bytes=8 * 1024 * 1024):
    """logits: [B, N, C], targets: [B, N] int, weights: [B, C] -> scalar f32."""
    B, N, C = logits.shape
    if weights is None:
        weights = jnp.ones((B, C), dtype=logits.dtype)

    itemsize = jnp.dtype(logits.dtype).itemsize
    slab_bytes = N * C * itemsize
    if slab_bytes <= vmem_block_bytes:
        # Whole (N, C) slab fits the budget: batch several entries per grid step.
        tn = N
        tb = _divisor_tile(B, max(1, vmem_block_bytes // max(1, slab_bytes)))
    else:
        # Tile the sample axis; keep the full class row for the log-softmax.
        tb = 1
        max_rows = max(8, vmem_block_bytes // (C * itemsize))
        tn = _divisor_tile(N, max_rows, multiple=8)

    gb, gn = B // tb, N // tn

    t3 = targets.reshape(B, N, 1).astype(jnp.int32)
    w3 = weights.reshape(B, 1, C)

    partial = pl.pallas_call(
        _wce_kernel,
        out_shape=jax.ShapeDtypeStruct((B, 128), jnp.float32),
        grid_spec=pltpu.PrefetchScalarGridSpec(
            num_scalar_prefetch=0,
            grid=(gb, gn),
            in_specs=[
                pl.BlockSpec((tb, tn, C), lambda b, n: (b, n, 0)),  # logits (native dtype)
                pl.BlockSpec((tb, tn, 1), lambda b, n: (b, n, 0)),  # targets
                pl.BlockSpec((tb, 1, C), lambda b, n: (b, 0, 0)),   # class weights
            ],
            out_specs=pl.BlockSpec((tb, 128), lambda b, n: (b, 0)),  # per-b partials
        ),
        compiler_params=pltpu.CompilerParams(
            # Batch axis is independent across grid steps -> megacore-shardable (v7x).
            # N axis is the resident-accumulator (reduction) axis.
            dimension_semantics=("parallel", "arbitrary"),
            vmem_limit_bytes=32 * 1024 * 1024,  # raise v5e's 16 MiB default; safe on v7x
        ),
    )(logits, t3, w3)

    per_b = partial[:, 0]  # (B,) per-list-element 'sum' losses
    return jnp.mean(per_b) if reduction == "mean" else jnp.sum(per_b)


if __name__ == "__main__":
    key = jax.random.PRNGKey(0)
    k1, k2, k3 = jax.random.split(key, 3)

    B, N, C = 2, 8, 32  # list length, samples per element, num classes
    logits = jax.random.normal(k1, (B, N, C), dtype=jnp.float32)
    targets = jax.random.randint(k2, (B, N), 0, C, dtype=jnp.int32)
    weights = jax.random.uniform(k3, (B, C), minval=0.5, maxval=1.5, dtype=jnp.float32)

    loss = weighted_cross_entropy_loss(logits, targets, weights, reduction="mean")
    loss = jax.block_until_ready(loss)

    # Pure-JAX reference (same math as F.cross_entropy with weight, reduction='sum').
    logp = jax.nn.log_softmax(logits, axis=-1)
    oh = jax.nn.one_hot(targets, C, dtype=jnp.float32)
    per_sample = -jnp.sum(oh * logp, axis=-1) * jnp.sum(oh * weights[:, None, :], axis=-1)
    ref = jnp.mean(jnp.sum(per_sample, axis=-1))

    assert jnp.allclose(loss, ref, rtol=1e-5, atol=1e-5), (loss, ref)

    # Also sanity-check the 'sum' reduction path.
    loss_sum = jax.block_until_ready(
        weighted_cross_entropy_loss(logits, targets, weights, reduction="sum"))
    ref_sum = jnp.sum(jnp.sum(per_sample, axis=-1))
    assert jnp.allclose(loss_sum, ref_sum, rtol=1e-5, atol=1e-5), (loss_sum, ref_sum)

    print("KERNEL_OK")
</pallas_src>

<mosaic_0001>
module attributes {stable_mosaic.version = 11 : i64} {
  func.func @_wce_kernel(%arg0: i32, %arg1: i32, %arg2: memref<2x8x32xf32, #tpu.memory_space<vmem>>, %arg3: memref<2x8x1xi32, #tpu.memory_space<vmem>>, %arg4: memref<2x1x32xf32, #tpu.memory_space<vmem>>, %arg5: memref<2x128xf32, #tpu.memory_space<vmem>>) attributes {dimension_semantics = [#tpu.dimension_semantics<parallel>, #tpu.dimension_semantics<arbitrary>], iteration_bounds = array<i64: 1, 1>, scalar_prefetch = 0 : i64, scratch_operands = 0 : i64, tpu.core_type = #tpu.core_type<tc>, window_params = [{transform_indices = @transform_0, window_bounds = array<i64: 2, 8, 32>}, {transform_indices = @transform_1, window_bounds = array<i64: 2, 8, 1>}, {transform_indices = @transform_2, window_bounds = array<i64: 2, 1, 32>}, {transform_indices = @transform_3, window_bounds = array<i64: 2, 128>}]} {
    %c0_i32 = arith.constant 0 : i32
    %0 = arith.cmpi eq, %arg1, %c0_i32 : i32
    %1 = arith.extui %0 : i1 to i32
    %c0_i32_0 = arith.constant 0 : i32
    %2 = arith.cmpi ne, %1, %c0_i32_0 : i32
    scf.if %2 {
      %cst_16 = arith.constant 0.000000e+00 : f32
      %32 = vector.broadcast %cst_16 : f32 to vector<2x128xf32>
      %c0_17 = arith.constant 0 : index
      %c0_18 = arith.constant 0 : index
      %33 = vector.load %arg5[%c0_17, %c0_18] : memref<2x128xf32, #tpu.memory_space<vmem>>, vector<2x128xf32>
      tpu.vector_store %arg5[%c0_17, %c0_18], %32 {strides = array<i32>} : memref<2x128xf32, #tpu.memory_space<vmem>>, vector<2x128xf32>,
    } else {
    }
    %c0 = arith.constant 0 : index
    %c0_1 = arith.constant 0 : index
    %c0_2 = arith.constant 0 : index
    %3 = vector.load %arg2[%c0, %c0_1, %c0_2] : memref<2x8x32xf32, #tpu.memory_space<vmem>>, vector<2x8x32xf32>
    %c0_3 = arith.constant 0 : index
    %c0_4 = arith.constant 0 : index
    %c0_5 = arith.constant 0 : index
    %4 = vector.load %arg3[%c0_3, %c0_4, %c0_5] : memref<2x8x1xi32, #tpu.memory_space<vmem>>, vector<2x8x1xi32>
    %c0_6 = arith.constant 0 : index
    %c0_7 = arith.constant 0 : index
    %c0_8 = arith.constant 0 : index
    %5 = vector.load %arg4[%c0_6, %c0_7, %c0_8] : memref<2x1x32xf32, #tpu.memory_space<vmem>>, vector<2x1x32xf32>
    %6 = tpu.iota {dimensions = array<i32: 2>} : vector<2x8x32xi32>
    %7 = vector.broadcast %4 : vector<2x8x1xi32> to vector<2x8x32xi32>
    %8 = arith.cmpi eq, %6, %7 : vector<2x8x32xi32>
    %9 = arith.extui %8 : vector<2x8x32xi1> to vector<2x8x32xi32>
    %10 = arith.sitofp %9 : vector<2x8x32xi32> to vector<2x8x32xf32>
    %cst = arith.constant dense<0xFF800000> : vector<2x8xf32>
    %11 = vector.multi_reduction <maximumf>, %3, %cst [2] : vector<2x8x32xf32> to vector<2x8xf32>
    %12 = vector.shape_cast %11 : vector<2x8xf32> to vector<2x8x1xf32>
    %13 = vector.broadcast %12 : vector<2x8x1xf32> to vector<2x8x32xf32>
    %14 = arith.subf %3, %13 : vector<2x8x32xf32>
    %15 = math.exp %14 : vector<2x8x32xf32>
    %cst_9 = arith.constant dense<0.000000e+00> : vector<2x8xf32>
    %16 = vector.multi_reduction <add>, %15, %cst_9 [2] : vector<2x8x32xf32> to vector<2x8xf32>
    %17 = vector.shape_cast %16 : vector<2x8xf32> to vector<2x8x1xf32>
    %18 = math.log %17 : vector<2x8x1xf32>
    %19 = arith.addf %12, %18 : vector<2x8x1xf32>
    %20 = vector.broadcast %19 : vector<2x8x1xf32> to vector<2x8x32xf32>
    %21 = arith.subf %20, %3 : vector<2x8x32xf32>
    %22 = vector.broadcast %5 : vector<2x1x32xf32> to vector<2x8x32xf32>
    %23 = arith.mulf %22, %21 : vector<2x8x32xf32>
    %24 = arith.mulf %10, %23 : vector<2x8x32xf32>
    %cst_10 = arith.constant dense<0.000000e+00> : vector<2x8xf32>
    %25 = vector.multi_reduction <add>, %24, %cst_10 [2] : vector<2x8x32xf32> to vector<2x8xf32>
    %cst_11 = arith.constant dense<0.000000e+00> : vector<2xf32>
    %26 = vector.multi_reduction <add>, %25, %cst_11 [1] : vector<2x8xf32> to vector<2xf32>
    %27 = vector.shape_cast %26 : vector<2xf32> to vector<2x1xf32>
    %c0_12 = arith.constant 0 : index
    %c0_13 = arith.constant 0 : index
    %28 = vector.load %arg5[%c0_12, %c0_13] : memref<2x128xf32, #tpu.memory_space<vmem>>, vector<2x128xf32>
    %29 = vector.broadcast %27 : vector<2x1xf32> to vector<2x128xf32>
    %30 = arith.addf %28, %29 : vector<2x128xf32>
    %c0_14 = arith.constant 0 : index
    %c0_15 = arith.constant 0 : index
    %31 = vector.load %arg5[%c0_14, %c0_15] : memref<2x128xf32, #tpu.memory_space<vmem>>, vector<2x128xf32>
    tpu.vector_store %arg5[%c0_14, %c0_15], %30 {strides = array<i32>} : memref<2x128xf32, #tpu.memory_space<vmem>>, vector<2x128xf32>,
    return
  }
  func.func @transform_0(%arg0: i32, %arg1: i32) -> (i32, i32, i32) {
    %c0_i32 = arith.constant 0 : i32
    %c0_i32_0 = arith.constant 0 : i32
    return %arg0, %arg1, %c0_i32 : i32, i32, i32
  }
  func.func @transform_1(%arg0: i32, %arg1: i32) -> (i32, i32, i32) {
    %c0_i32 = arith.constant 0 : i32
    %c0_i32_0 = arith.constant 0 : i32
    return %arg0, %arg1, %c0_i32 : i32, i32, i32
  }
  func.func @transform_2(%arg0: i32, %arg1: i32) -> (i32, i32, i32) {
    %c0_i32 = arith.constant 0 : i32
    %c0_i32_0 = arith.constant 0 : i32
    %c0_i32_1 = arith.constant 0 : i32
    return %arg0, %c0_i32, %c0_i32_0 : i32, i32, i32
  }
  func.func @transform_3(%arg0: i32, %arg1: i32) -> (i32, i32) {
    %c0_i32 = arith.constant 0 : i32
    %c0_i32_0 = arith.constant 0 : i32
    return %arg0, %c0_i32 : i32, i32
  }
}

</mosaic_0001>

<llo_original>
// kernel: tpu_custom_call.1
$region0: #{tpu_custom_call.1}
  #allocation0 [shape = 'u32[]', space=smem, size = 0x4, offset = 0x4, fixed_abs, tag = 'smem constant byte address 0x4 - core index']
  #allocation1 [shape = 'u32[72,128]{1,0:T(1,128)}', space=vmem, size = 0x9000, scoped, tag = 'internal scratch']
  %s0 = inlined_call_operand.vmem [shape: f32[2,8,32], index: 0, kind: input, shape index: {}]
  %s1 = inlined_call_operand.vmem [shape: s32[2,8,1], index: 1, kind: input, shape index: {}]
  %s2 = inlined_call_operand.vmem [shape: f32[2,1,32], index: 2, kind: input, shape index: {}]
  %s3 = inlined_call_operand.hbm [shape: f32[2,128], index: 3, kind: output, shape index: {}]
  %s4 = sld [smem:[#allocation0]]
  $region26: #{tpu_custom_call.1} parent=0
    _
  %s6 = ssub.s32 1, %s4
  %s7 = scalar_select 0, %s6, %s4
  $region1: #{tpu_custom_call.1} parent=0
    #allocation2 [shape = 'u8[1024]{0}', space=vmem, size = 0x400, scoped, tag = 'output window, operand 0, single buffered']
    #allocation3 [shape = 's32[1]{0}', space=sflag, size = 0x4, scoped, tag = 'scoped memory for tpu_custom_call.1']
    %8 = vsyncpa [#allocation3], 0
    // Predicated region
    $region2: #{tpu_custom_call.1} parent=1 // pred_check
      _
    $region3: #{tpu_custom_call.1} parent=1 // pred_check_branch
      %10 = sbr.rel (0) target = $region5
    $region4: #{tpu_custom_call.1} parent=1 // pred_region
      _
    $region5: #{tpu_custom_call.1} parent=1 // pred_fallthru
      _
    // Predicated region
    $region6: #{tpu_custom_call.1} parent=1 // pred_check
      _
    $region7: #{tpu_custom_call.1} parent=1 // pred_check_branch
      %12 = sbr.rel (0) target = $region9
    $region8: #{tpu_custom_call.1} parent=1 // pred_region
      _
    $region9: #{tpu_custom_call.1} parent=1 // pred_fallthru
      _
    // Predicated region
    $region10: #{tpu_custom_call.1} parent=1 // pred_check
      _
    $region11: #{tpu_custom_call.1} parent=1 // pred_check_branch
      %14 = sbr.rel (0) target = $region13
    $region12: #{tpu_custom_call.1} parent=1 // pred_region
      _
    $region13: #{tpu_custom_call.1} parent=1 // pred_fallthru
      _
    %p15 = scmp.eq.s32.totalorder 0, 0
    // Predicated region
    $region14: #{tpu_custom_call.1} parent=1 // pred_check
      %p16 = pneg %p15
    $region15: #{tpu_custom_call.1} parent=1 // pred_check_branch
      %18 = sbr.rel (%p16) target = $region17
    $region16: #{tpu_custom_call.1} parent=1 // pred_region
      %19 = vst [vmem:[#allocation2] sm:$0x3] 0.0
    $region17: #{tpu_custom_call.1} parent=1 // pred_fallthru
      _
    %v20 = vld [vmem:[%s0] sm:$0xff]
    %v21 = vld [vmem:[%s0 + $0x8] sm:$0xff]
    %v22 = vld [vmem:[%s1] sm:$0xff]
    %v23 = vld [vmem:[%s1 + $0x8] sm:$0xff]
    %v24 = vld [vmem:[%s2] sm:$0x1]
    %v25 = vld [vmem:[%s2 + $0x1] sm:$0x1]
    %v26 = vlaneseq
    %v27 = vand.u32 %v26, 127
    %28 = vset.pattern.permute.xlu0 0
    %29 = vperm.xlu0 %28, %v22
    %v30 = vpop.permute.xlu0 %29
    %31 = vset.pattern.permute.xlu0 0
    %32 = vperm.xlu0 %31, %v23
    %v33 = vpop.permute.xlu0 %32
    %vm34 = vcmp.eq.s32.totalorder %v27, %v30
    %vm35 = vcmp.eq.s32.totalorder %v27, %v33
    %v36 = vsel %vm34, 1, 0
    %v37 = vsel %vm35, 1, 0
    %v38 = vcvt.s32.f32 %v36
    %v39 = vcvt.s32.f32 %v37
    %vm40 = vcmask 261120
    %v41 = vsel %vm40, %v20, -inf
    %42 = vmax.xlane.f32.xlu0 %v41
    %v43 = vpop.xlane.xlu0 %42
    %v44 = vsel %vm40, %v21, -inf
    %45 = vmax.xlane.f32.xlu0 %v44
    %v46 = vpop.xlane.xlu0 %45
    %v47 = vsub.f32 %v20, %v43
    %v48 = vsub.f32 %v21, %v46
    %v49 = vmul.f32 %v47, 1.442695
    %v50 = vpow.pop %v49
    %v51 = vmul.f32 %v48, 1.442695
    %v52 = vpow.pop %v51
    %v53 = vsel %vm40, %v50, 0.0
    %54 = vadd.xlane.f32.xlu0 %v53
    %v55 = vpop.xlane.xlu0 %54
    %v56 = vsel %vm40, %v52, 0.0
    %57 = vadd.xlane.f32.xlu0 %v56
    %v58 = vpop.xlane.xlu0 %57
    %v59 = vlog2.pop %v55
    %v60 = vmul.f32 %v59, 0.6931472
    %v61 = vlog2.pop %v58
    %v62 = vmul.f32 %v61, 0.6931472
    %v63 = vadd.f32 %v43, %v60
    %v64 = vadd.f32 %v46, %v62
    %v65 = vsub.f32 %v63, %v20
    %v66 = vsub.f32 %v64, %v21
    %v69 = vperm.slane %v24, 0
    %v70 = vperm.slane %v25, 0
    %v73 = vmul.f32 %v69, %v65
    %v74 = vmul.f32 %v70, %v66
    %v75 = vmul.f32 %v38, %v73
    %v76 = vmul.f32 %v39, %v74
    %v77 = vsel %vm40, %v75, 0.0
    %78 = vadd.xlane.f32.xlu0 %v77
    %v79 = vpop.xlane.xlu0 %78
    %v80 = vsel %vm40, %v76, 0.0
    %81 = vadd.xlane.f32.xlu0 %v80
    %v82 = vpop.xlane.xlu0 %81
    %v85 = vperm.slane %v79, %v27
    %v86 = vperm.slane %v82, %v27
    %vm87 = vcmask 1041409
    %v88 = vsel %vm87, %v86, %v85
    %vm90 = vcmask 58368
    %v91 = vsel %vm90, %v88, 0.0
    %92 = vadd.xlane.f32.xlu0 %v91
    %v93 = vpop.xlane.xlu0 %92
    %v94 = vld [vmem:[#allocation2] sm:$0x3]
    %v95 = vadd.f32 %v94, %v93
    %96 = vst [vmem:[#allocation2] sm:$0x3] %v95
    // Predicated region
    $region18: #{tpu_custom_call.1} parent=1 // pred_check
      _
    $region19: #{tpu_custom_call.1} parent=1 // pred_check_branch
      %98 = sbr.rel (0) target = $region21
    $region20: #{tpu_custom_call.1} parent=1 // pred_region
      %100 = vsyncadd [#allocation3], 0
      %s102 = sshll.u32 [#allocation2], 4
      %s103 = int_to_ptr.vmem [resolvable:$true] %s102
      %s104 = sshll.u32 %s3, 4
      %s105 = int_to_ptr.hbm [resolvable:$true] %s104
      %107 = dma.vmem_to_hbm [thread:$0]  %s103, 32, %s105, [#allocation3]
    $region21: #{tpu_custom_call.1} parent=1 // pred_fallthru
      _
    // Predicated region
    $region22: #{tpu_custom_call.1} parent=1 // pred_check
      _
    $region23: #{tpu_custom_call.1} parent=1 // pred_check_branch
      %109 = sbr.rel (0) target = $region25
    $region24: #{tpu_custom_call.1} parent=1 // pred_region
      %111 = dma.done [#allocation3], 32
    $region25: #{tpu_custom_call.1} parent=1 // pred_fallthru
      _
    %112 = vsyncpa [#allocation3], 1

</llo_original>
